<compile_context>
chip_gen: v7x
topology: tpu7x:2x2x1
jax: 0.10.0
libtpu: 0.0.40
codegen_flags: <defaults>
</compile_context>

<pallas_src>
import functools

import jax
import jax.numpy as jnp
from jax.experimental import pallas as pl
from jax.experimental.pallas import tpu as pltpu


def _mha_kernel(x_ref, wqkv_ref, bqkv_ref, wo_ref, bo_ref, out_ref, *,
                seq_len, num_heads, head_dim):
    embed_dim = num_heads * head_dim

    # Activations for this batch element: (S, E) f32 in VMEM.
    x = x_ref[...]

    # Fused Q/K/V projection: one MXU matmul, bf16 operands, f32 accumulation.
    # Softmax scale is already folded into the Q columns of wqkv/bqkv (host side,
    # before the bf16 cast).
    qkv = jnp.dot(x.astype(jnp.bfloat16), wqkv_ref[...],
                  preferred_element_type=jnp.float32) + bqkv_ref[...]      # (S, 3E) f32

    q = qkv[:, :embed_dim]
    k = qkv[:, embed_dim:2 * embed_dim]
    v = qkv[:, 2 * embed_dim:]

    # Heads become a leading batch axis (major-dim transpose) instead of
    # per-head lane slices in an unrolled Python loop.
    def to_heads(t, dtype):
        t = t.reshape(seq_len, num_heads, head_dim)
        return jnp.transpose(t, (1, 0, 2)).astype(dtype)                   # (H, S, D)

    qh = to_heads(q, jnp.bfloat16)
    kh = to_heads(k, jnp.bfloat16)
    vh = to_heads(v, jnp.bfloat16)

    # Scores: contract on the last dim of both operands (no explicit K^T).
    s = jnp.einsum('hqd,hkd->hqk', qh, kh,
                   preferred_element_type=jnp.float32)                     # (H, S, S) f32

    # Numerically stable softmax; statistics in f32; divide -> EUP reciprocal.
    s = s - jnp.max(s, axis=-1, keepdims=True)
    p = jnp.exp(s)
    p = p * pl.reciprocal(jnp.sum(p, axis=-1, keepdims=True), approx=True)

    # TODO(synk): flash-style KV-tiled online softmax for production S.
    o = jnp.einsum('hqk,hkd->hqd', p.astype(jnp.bfloat16), vh,
                   preferred_element_type=jnp.float32)                     # (H, S, D) f32

    # Head-concat is a free reshape back to (S, E); one full-depth out-projection.
    o = jnp.transpose(o, (1, 0, 2)).reshape(seq_len, embed_dim)
    out = jnp.dot(o.astype(jnp.bfloat16), wo_ref[...],
                  preferred_element_type=jnp.float32) + bo_ref[...]        # (S, E) f32

    out_ref[...] = out.astype(out_ref.dtype)


def multi_head_attention(x, params, *, num_heads):
    """x: (B, S, E) float32. params: dict of (E, E) weights and (1, E) biases."""
    B, S, E = x.shape
    assert E % num_heads == 0, "embed_dim must be divisible by num_heads"
    head_dim = E // num_heads
    scale = head_dim ** (-0.5)

    # Host-side packing: fold the softmax scale into the Q projection (before the
    # bf16 cast), fuse Q/K/V into one (E, 3E) weight / (1, 3E) bias, and store the
    # matmul weights in bf16 (bf16-native MXU; halves resident weight VMEM — this
    # is what keeps weights resident on v7x's 64 MiB at production E).
    w_qkv = jnp.concatenate(
        [params["wq"] * scale, params["wk"], params["wv"]], axis=1
    ).astype(jnp.bfloat16)                                                  # (E, 3E)
    b_qkv = jnp.concatenate(
        [params["bq"] * scale, params["bk"], params["bv"]], axis=1
    ).astype(jnp.float32)                                                   # (1, 3E)
    w_o = params["wo"].astype(jnp.bfloat16)                                 # (E, E)
    b_o = params["bo"].astype(jnp.float32)                                  # (1, E)

    kernel = functools.partial(
        _mha_kernel, seq_len=S, num_heads=num_heads, head_dim=head_dim)

    # Grid over batch: x/out are pipelined row blocks of S rows; weights/biases use
    # constant index_maps so they are fetched once and stay VMEM-resident.
    row_spec = pl.BlockSpec((None, S, E), lambda b: (b, 0, 0))
    const2d = lambda shape: pl.BlockSpec(shape, lambda b: (0, 0))

    flops = 8 * B * S * E * E + 4 * B * S * S * E          # qkv + out proj + attention
    cost = pl.CostEstimate(
        flops=flops,
        transcendentals=B * num_heads * S * S,             # exp on the scores
        bytes_accessed=(4 * 2 * B * S * E                  # x in + out (f32)
                        + 2 * (3 * E * E + E * E)          # bf16 weights
                        + 4 * (3 * E + E)),                # f32 biases
    )

    out = pl.pallas_call(
        kernel,
        out_shape=jax.ShapeDtypeStruct((B, S, E), x.dtype),
        grid=(B,),
        in_specs=[
            row_spec,                      # x
            const2d((E, 3 * E)),           # fused qkv weight (resident)
            const2d((1, 3 * E)),           # fused qkv bias   (resident)
            const2d((E, E)),               # out-proj weight  (resident)
            const2d((1, E)),               # out-proj bias    (resident)
        ],
        out_specs=row_spec,
        compiler_params=pltpu.CompilerParams(
            dimension_semantics=("parallel",),             # v7x: shard across both TCs
            vmem_limit_bytes=64 * 1024 * 1024,
        ),
        cost_estimate=cost,
    )(x, w_qkv, b_qkv, w_o, b_o)

    return out


def _reference_mha(x, params, *, num_heads):
    """Pure-JAX f32 reference mirroring the PyTorch forward pass exactly."""
    B, S, E = x.shape
    D = E // num_heads
    scale = D ** (-0.5)

    def proj(w, b):
        return x @ w + b  # (B, S, E)

    q = proj(params["wq"], params["bq"]).reshape(B, S, num_heads, D).transpose(0, 2, 1, 3)
    k = proj(params["wk"], params["bk"]).reshape(B, S, num_heads, D).transpose(0, 2, 1, 3)
    v = proj(params["wv"], params["bv"]).reshape(B, S, num_heads, D).transpose(0, 2, 1, 3)

    attn = jnp.einsum("bhqd,bhkd->bhqk", q, k) * scale
    attn = jax.nn.softmax(attn, axis=-1)
    out = jnp.einsum("bhqk,bhkd->bhqd", attn, v)
    out = out.transpose(0, 2, 1, 3).reshape(B, S, E)
    return out @ params["wo"] + params["bo"]


if __name__ == "__main__":
    # Small shapes consistent with the module's forward: (B, S, E), E % heads == 0.
    # NOTE: these toy shapes pad to single vreg tiles — do not use for benchmarking.
    B, S, E, H = 2, 8, 32, 4

    key = jax.random.PRNGKey(0)
    keys = jax.random.split(key, 9)

    init = lambda k, shape: (jax.random.normal(k, shape, dtype=jnp.float32) * 0.05)
    params = {
        "wq": init(keys[0], (E, E)), "bq": init(keys[1], (1, E)),
        "wk": init(keys[2], (E, E)), "bk": init(keys[3], (1, E)),
        "wv": init(keys[4], (E, E)), "bv": init(keys[5], (1, E)),
        "wo": init(keys[6], (E, E)), "bo": init(keys[7], (1, E)),
    }
    x = jax.random.normal(keys[8], (B, S, E), dtype=jnp.float32)

    out = multi_head_attention(x, params, num_heads=H)
    out = jax.block_until_ready(out)

    ref = _reference_mha(x, params, num_heads=H)
    assert out.shape == (B, S, E)
    # bf16 MXU operands + approx reciprocal -> loosened tolerance vs the f32 reference.
    assert jnp.allclose(out, ref, atol=2e-2, rtol=2e-2), "mismatch vs reference"

    print("KERNEL_OK")
</pallas_src>

<mosaic_0001>
module attributes {stable_mosaic.version = 11 : i64} {
  func.func @_mha_kernel(%arg0: i32, %arg1: memref<1x8x32xf32, #tpu.memory_space<vmem>>, %arg2: memref<32x96xbf16, #tpu.memory_space<vmem>>, %arg3: memref<1x96xf32, #tpu.memory_space<vmem>>, %arg4: memref<32x32xbf16, #tpu.memory_space<vmem>>, %arg5: memref<1x32xf32, #tpu.memory_space<vmem>>, %arg6: memref<1x8x32xf32, #tpu.memory_space<vmem>>) attributes {dimension_semantics = [#tpu.dimension_semantics<parallel>], iteration_bounds = array<i64: 2>, scalar_prefetch = 0 : i64, scratch_operands = 0 : i64, tpu.core_type = #tpu.core_type<tc>, window_params = [{transform_indices = @transform_0, window_bounds = array<i64: 1, 8, 32>}, {pipeline_mode = #tpu.pipeline_mode<synchronous>, transform_indices = @transform_1, window_bounds = array<i64: 32, 96>}, {pipeline_mode = #tpu.pipeline_mode<synchronous>, transform_indices = @transform_2, window_bounds = array<i64: 1, 96>}, {pipeline_mode = #tpu.pipeline_mode<synchronous>, transform_indices = @transform_3, window_bounds = array<i64: 32, 32>}, {pipeline_mode = #tpu.pipeline_mode<synchronous>, transform_indices = @transform_4, window_bounds = array<i64: 1, 32>}, {transform_indices = @transform_5, window_bounds = array<i64: 1, 8, 32>}]} {
    %c0 = arith.constant 0 : index
    %c0_0 = arith.constant 0 : index
    %c0_1 = arith.constant 0 : index
    %0 = vector.load %arg1[%c0, %c0_0, %c0_1] : memref<1x8x32xf32, #tpu.memory_space<vmem>>, vector<1x8x32xf32>
    %1 = vector.shape_cast %0 : vector<1x8x32xf32> to vector<8x32xf32>
    %2 = arith.truncf %1 : vector<8x32xf32> to vector<8x32xbf16>
    %c0_2 = arith.constant 0 : index
    %c0_3 = arith.constant 0 : index
    %3 = vector.load %arg2[%c0_2, %c0_3] : memref<32x96xbf16, #tpu.memory_space<vmem>>, vector<32x96xbf16>
    %cst = arith.constant dense<0.000000e+00> : vector<8x96xf32>
    %4 = tpu.matmul %2, %3, %cst {dimension_numbers = #tpu.dot_dimension_numbers<[1], [0], [0], [1], [0, 0, 1, 1], [], []>} : vector<8x32xbf16>, vector<32x96xbf16>, vector<8x96xf32> -> vector<8x96xf32>
    %c0_4 = arith.constant 0 : index
    %c0_5 = arith.constant 0 : index
    %5 = vector.load %arg3[%c0_4, %c0_5] : memref<1x96xf32, #tpu.memory_space<vmem>>, vector<1x96xf32>
    %6 = vector.broadcast %5 : vector<1x96xf32> to vector<8x96xf32>
    %7 = arith.addf %4, %6 : vector<8x96xf32>
    %8 = vector.extract_strided_slice %7 {offsets = [0, 0], sizes = [8, 32], strides = [1, 1]} : vector<8x96xf32> to vector<8x32xf32>
    %9 = vector.extract_strided_slice %7 {offsets = [0, 32], sizes = [8, 32], strides = [1, 1]} : vector<8x96xf32> to vector<8x32xf32>
    %10 = vector.extract_strided_slice %7 {offsets = [0, 64], sizes = [8, 32], strides = [1, 1]} : vector<8x96xf32> to vector<8x32xf32>
    %11 = vector.shape_cast %8 : vector<8x32xf32> to vector<8x4x8xf32>
    %12 = tpu.transpose %11, [1, 0, 2] : vector<8x4x8xf32> -> vector<4x8x8xf32>
    %13 = arith.truncf %12 : vector<4x8x8xf32> to vector<4x8x8xbf16>
    %14 = vector.shape_cast %9 : vector<8x32xf32> to vector<8x4x8xf32>
    %15 = tpu.transpose %14, [1, 0, 2] : vector<8x4x8xf32> -> vector<4x8x8xf32>
    %16 = arith.truncf %15 : vector<4x8x8xf32> to vector<4x8x8xbf16>
    %17 = vector.shape_cast %10 : vector<8x32xf32> to vector<8x4x8xf32>
    %18 = tpu.transpose %17, [1, 0, 2] : vector<8x4x8xf32> -> vector<4x8x8xf32>
    %19 = arith.truncf %18 : vector<4x8x8xf32> to vector<4x8x8xbf16>
    "tpu.trace_start"() <{level = 10 : i32, message = "hqd,hkd->hqk"}> : () -> ()
    %cst_6 = arith.constant dense<0.000000e+00> : vector<4x8x8xf32>
    %20 = tpu.matmul %13, %16, %cst_6 {dimension_numbers = #tpu.dot_dimension_numbers<[2], [2], [1], [1], [0, 0, 0, 1, 1, 1], [0], [0]>} : vector<4x8x8xbf16>, vector<4x8x8xbf16>, vector<4x8x8xf32> -> vector<4x8x8xf32>
    "tpu.trace_stop"() : () -> ()
    %cst_7 = arith.constant dense<0xFF800000> : vector<4x8xf32>
    %21 = vector.multi_reduction <maximumf>, %20, %cst_7 [2] : vector<4x8x8xf32> to vector<4x8xf32>
    %22 = vector.shape_cast %21 : vector<4x8xf32> to vector<4x8x1xf32>
    %23 = vector.broadcast %22 : vector<4x8x1xf32> to vector<4x8x8xf32>
    %24 = arith.subf %20, %23 : vector<4x8x8xf32>
    %25 = math.exp %24 : vector<4x8x8xf32>
    %cst_8 = arith.constant dense<0.000000e+00> : vector<4x8xf32>
    %26 = vector.multi_reduction <add>, %25, %cst_8 [2] : vector<4x8x8xf32> to vector<4x8xf32>
    %27 = vector.shape_cast %26 : vector<4x8xf32> to vector<4x8x1xf32>
    %28 = tpu.reciprocal %27 {approx = true} : vector<4x8x1xf32> -> vector<4x8x1xf32>
    %29 = vector.broadcast %28 : vector<4x8x1xf32> to vector<4x8x8xf32>
    %30 = arith.mulf %25, %29 : vector<4x8x8xf32>
    %31 = arith.truncf %30 : vector<4x8x8xf32> to vector<4x8x8xbf16>
    "tpu.trace_start"() <{level = 10 : i32, message = "hqk,hkd->hqd"}> : () -> ()
    %cst_9 = arith.constant dense<0.000000e+00> : vector<4x8x8xf32>
    %32 = tpu.matmul %31, %19, %cst_9 {dimension_numbers = #tpu.dot_dimension_numbers<[2], [1], [1], [2], [0, 0, 0, 1, 1, 2], [0], [0]>} : vector<4x8x8xbf16>, vector<4x8x8xbf16>, vector<4x8x8xf32> -> vector<4x8x8xf32>
    "tpu.trace_stop"() : () -> ()
    %33 = tpu.transpose %32, [1, 0, 2] : vector<4x8x8xf32> -> vector<8x4x8xf32>
    %34 = vector.shape_cast %33 : vector<8x4x8xf32> to vector<8x32xf32>
    %35 = arith.truncf %34 : vector<8x32xf32> to vector<8x32xbf16>
    %c0_10 = arith.constant 0 : index
    %c0_11 = arith.constant 0 : index
    %36 = vector.load %arg4[%c0_10, %c0_11] : memref<32x32xbf16, #tpu.memory_space<vmem>>, vector<32x32xbf16>
    %cst_12 = arith.constant dense<0.000000e+00> : vector<8x32xf32>
    %37 = tpu.matmul %35, %36, %cst_12 {dimension_numbers = #tpu.dot_dimension_numbers<[1], [0], [0], [1], [0, 0, 1, 1], [], []>} : vector<8x32xbf16>, vector<32x32xbf16>, vector<8x32xf32> -> vector<8x32xf32>
    %c0_13 = arith.constant 0 : index
    %c0_14 = arith.constant 0 : index
    %38 = vector.load %arg5[%c0_13, %c0_14] : memref<1x32xf32, #tpu.memory_space<vmem>>, vector<1x32xf32>
    %39 = vector.broadcast %38 : vector<1x32xf32> to vector<8x32xf32>
    %40 = arith.addf %37, %39 : vector<8x32xf32>
    %c0_15 = arith.constant 0 : index
    %c0_16 = arith.constant 0 : index
    %c0_17 = arith.constant 0 : index
    %41 = vector.load %arg6[%c0_15, %c0_16, %c0_17] : memref<1x8x32xf32, #tpu.memory_space<vmem>>, vector<1x8x32xf32>
    %42 = vector.shape_cast %41 : vector<1x8x32xf32> to vector<8x32xf32>
    %43 = vector.shape_cast %40 : vector<8x32xf32> to vector<1x8x32xf32>
    tpu.vector_store %arg6[%c0_15, %c0_16, %c0_17], %43 {strides = array<i32>} : memref<1x8x32xf32, #tpu.memory_space<vmem>>, vector<1x8x32xf32>,
    return
  }
  func.func @transform_0(%arg0: i32) -> (i32, i32, i32) {
    %c0_i32 = arith.constant 0 : i32
    %c0_i32_0 = arith.constant 0 : i32
    %c0_i32_1 = arith.constant 0 : i32
    return %arg0, %c0_i32, %c0_i32_0 : i32, i32, i32
  }
  func.func @transform_1(%arg0: i32) -> (i32, i32) {
    %c0_i32 = arith.constant 0 : i32
    %c0_i32_0 = arith.constant 0 : i32
    %c0_i32_1 = arith.constant 0 : i32
    return %c0_i32, %c0_i32_0 : i32, i32
  }
  func.func @transform_2(%arg0: i32) -> (i32, i32) {
    %c0_i32 = arith.constant 0 : i32
    %c0_i32_0 = arith.constant 0 : i32
    %c0_i32_1 = arith.constant 0 : i32
    return %c0_i32, %c0_i32_0 : i32, i32
  }
  func.func @transform_3(%arg0: i32) -> (i32, i32) {
    %c0_i32 = arith.constant 0 : i32
    %c0_i32_0 = arith.constant 0 : i32
    %c0_i32_1 = arith.constant 0 : i32
    return %c0_i32, %c0_i32_0 : i32, i32
  }
  func.func @transform_4(%arg0: i32) -> (i32, i32) {
    %c0_i32 = arith.constant 0 : i32
    %c0_i32_0 = arith.constant 0 : i32
    %c0_i32_1 = arith.constant 0 : i32
    return %c0_i32, %c0_i32_0 : i32, i32
  }
  func.func @transform_5(%arg0: i32) -> (i32, i32, i32) {
    %c0_i32 = arith.constant 0 : i32
    %c0_i32_0 = arith.constant 0 : i32
    %c0_i32_1 = arith.constant 0 : i32
    return %arg0, %c0_i32, %c0_i32_0 : i32, i32, i32
  }
}

</mosaic_0001>

<llo_original>
// kernel: tpu_custom_call.1
$region0: #{tpu_custom_call.1}
  #allocation0 [shape = 'u32[]', space=smem, size = 0x4, offset = 0x4, fixed_abs, tag = 'smem constant byte address 0x4 - core index']
  #allocation1 [shape = 'u32[144,128]{1,0:T(1,128)}', space=vmem, size = 0x12000, scoped, tag = 'internal scratch']
  %s0 = inlined_call_operand.hbm [shape: f32[2,8,32], index: 0, kind: input, shape index: {}]
  %s1 = inlined_call_operand.hbm [shape: bf16[32,96], index: 1, kind: input, shape index: {}]
  %s2 = inlined_call_operand.hbm [shape: f32[1,96], index: 2, kind: input, shape index: {}]
  %s3 = inlined_call_operand.hbm [shape: bf16[32,32], index: 3, kind: input, shape index: {}]
  %s4 = inlined_call_operand.hbm [shape: f32[1,32], index: 4, kind: input, shape index: {}]
  %s5 = inlined_call_operand.hbm [shape: f32[2,8,32], index: 5, kind: output, shape index: {}]
  %s6 = sld [smem:[#allocation0]]
  $region73: #{tpu_custom_call.1} parent=0
    _
  %s8 = ssub.s32 1, %s6
  %s9 = scalar_select 0, %s8, %s6
  $region1: #{tpu_custom_call.1} parent=0
    #allocation2 [shape = 'u8[8192]{0}', space=vmem, size = 0x2000, scoped, tag = 'input window, operand 0']
    #allocation3 [shape = 's32[2]{0}', space=sflag, size = 0x8, scoped, tag = 'scoped memory for tpu_custom_call.1']
    #allocation4 [shape = 's32[2]{0}', space=sflag, size = 0x8, scoped, tag = 'scoped memory for tpu_custom_call.1']
    #allocation5 [shape = 'u8[8192]{0}', space=vmem, size = 0x2000, scoped, tag = 'input window, operand 1, single buffered']
    #allocation6 [shape = 's32[1]{0}', space=sflag, size = 0x4, scoped, tag = 'scoped memory for tpu_custom_call.1']
    #allocation7 [shape = 'u8[512]{0}', space=vmem, size = 0x400, scoped, tag = 'input window, operand 2, single buffered']
    #allocation8 [shape = 'u8[8192]{0}', space=vmem, size = 0x2000, scoped, tag = 'input window, operand 3, single buffered']
    #allocation9 [shape = 's32[1]{0}', space=sflag, size = 0x4, scoped, tag = 'scoped memory for tpu_custom_call.1']
    #allocation10 [shape = 'u8[512]{0}', space=vmem, size = 0x400, scoped, tag = 'input window, operand 4, single buffered']
    #allocation11 [shape = 'u8[8192]{0}', space=vmem, size = 0x2000, scoped, tag = 'output window, operand 0']
    %10 = vsyncpa [#allocation3], 0
    %s11 = scalar_lea.sflag [#allocation3], 1
    %12 = vsyncpa %s11, 0
    %13 = vsyncpa [#allocation6], 0
    %14 = vsyncpa [#allocation9], 0
    %15 = vsyncpa [#allocation4], 0
    %s16 = scalar_lea.sflag [#allocation4], 1
    %17 = vsyncpa %s16, 0
    loop: start=0, step=1, limit=4
    $region2: #{tpu_custom_call.1} parent=1 // loop_pre_header
      _
    $region3: #{tpu_custom_call.1} parent=1 // loop_header
      %s19 = sphi 0, %s23
      %p20 = scmp.ge.s32.totalorder %s19, 4
      %s29 = sphi 0, %s31
      %s32 = sphi 0, %s29
      %s33 = sphi 0, %s32
      %s49 = sphi 0, %s33
      %s53 = sphi 0, %s53
      %s55 = sphi 0, %s53
      %s56 = sphi 0, %s55
      %s70 = sphi 0, %s56
      %s74 = sphi 0, %s74
      %s76 = sphi 0, %s74
      %s77 = sphi 0, %s76
      %s91 = sphi 0, %s77
      %s95 = sphi 0, %s95
      %s97 = sphi 0, %s95
      %s98 = sphi 0, %s97
      %s112 = sphi 0, %s98
      %s116 = sphi 0, %s116
      %s118 = sphi 0, %s116
      %s119 = sphi 0, %s118
      %s133 = sphi 0, %s119
      %s139 = sphi 0, %s141
      %s142 = sphi 0, %s139
      %s143 = sphi 0, %s142
      %s159 = sphi 0, %s143
    $region4: #{tpu_custom_call.1} parent=1 // loop_header_branch
      %22 = sbr.rel (%p20) target = $region8
    $region5: #{tpu_custom_call.1} parent=1 // loop_body
      %s24 = ssub.s32 %s19, 1
      %s25 = ssub.s32 %s19, 2
      %s26 = sadd.s32 %s19, 1
      %s27 = ssub.s32 %s19, %s26
      %p28 = scmp.eq.s32.totalorder %s27, 0
      %s30 = sadd.s32 %s29, 1
      %s31 = scalar_select %p28, %s29, %s30
      %p34 = pneg %p28
      %p35 = scmp.eq.s32.totalorder %s19, 1
      %p36 = por %p34, %p35
      %p37 = scmp.ne.s32.totalorder %s29, %s32
      %p38 = scmp.eq.s32.totalorder %s19, 0
      %p39 = por %p37, %p38
      %p40 = scmp.ne.s32.totalorder %s29, %s32
      %p41 = scmp.eq.s32.totalorder %s24, 1
      %p42 = por %p40, %p41
      %p43 = scmp.ne.s32.totalorder %s32, %s33
      %p44 = scmp.eq.s32.totalorder %s24, 0
      %p45 = por %p43, %p44
      %p46 = scmp.ne.s32.totalorder %s32, %s33
      %p47 = scmp.eq.s32.totalorder %s25, 1
      %p48 = por %p46, %p47
      %p50 = scmp.ne.s32.totalorder %s33, %s49
      %p51 = scmp.eq.s32.totalorder %s25, 0
      %p52 = por %p50, %p51
      %s54 = sadd.s32 %s53, 1
      %p57 = scmp.eq.s32.totalorder %s19, 1
      %p58 = scmp.ne.s32.totalorder %s53, %s55
      %p59 = scmp.eq.s32.totalorder %s19, 0
      %p60 = por %p58, %p59
      %p61 = scmp.ne.s32.totalorder %s53, %s55
      %p62 = scmp.eq.s32.totalorder %s24, 1
      %p63 = por %p61, %p62
      %p64 = scmp.ne.s32.totalorder %s55, %s56
      %p65 = scmp.eq.s32.totalorder %s24, 0
      %p66 = por %p64, %p65
      %p67 = scmp.ne.s32.totalorder %s55, %s56
      %p68 = scmp.eq.s32.totalorder %s25, 1
      %p69 = por %p67, %p68
      %p71 = scmp.ne.s32.totalorder %s56, %s70
      %p72 = scmp.eq.s32.totalorder %s25, 0
      %p73 = por %p71, %p72
      %s75 = sadd.s32 %s74, 1
      %p78 = scmp.eq.s32.totalorder %s19, 1
      %p79 = scmp.ne.s32.totalorder %s74, %s76
      %p80 = scmp.eq.s32.totalorder %s19, 0
      %p81 = por %p79, %p80
      %p82 = scmp.ne.s32.totalorder %s74, %s76
      %p83 = scmp.eq.s32.totalorder %s24, 1
      %p84 = por %p82, %p83
      %p85 = scmp.ne.s32.totalorder %s76, %s77
      %p86 = scmp.eq.s32.totalorder %s24, 0
      %p87 = por %p85, %p86
      %p88 = scmp.ne.s32.totalorder %s76, %s77
      %p89 = scmp.eq.s32.totalorder %s25, 1
      %p90 = por %p88, %p89
      %p92 = scmp.ne.s32.totalorder %s77, %s91
      %p93 = scmp.eq.s32.totalorder %s25, 0
      %p94 = por %p92, %p93
      %s96 = sadd.s32 %s95, 1
      %p99 = scmp.eq.s32.totalorder %s19, 1
      %p100 = scmp.ne.s32.totalorder %s95, %s97
      %p101 = scmp.eq.s32.totalorder %s19, 0
      %p102 = por %p100, %p101
      %p103 = scmp.ne.s32.totalorder %s95, %s97
      %p104 = scmp.eq.s32.totalorder %s24, 1
      %p105 = por %p103, %p104
      %p106 = scmp.ne.s32.totalorder %s97, %s98
      %p107 = scmp.eq.s32.totalorder %s24, 0
      %p108 = por %p106, %p107
      %p109 = scmp.ne.s32.totalorder %s97, %s98
      %p110 = scmp.eq.s32.totalorder %s25, 1
      %p111 = por %p109, %p110
      %p113 = scmp.ne.s32.totalorder %s98, %s112
      %p114 = scmp.eq.s32.totalorder %s25, 0
      %p115 = por %p113, %p114
      %s117 = sadd.s32 %s116, 1
      %p120 = scmp.eq.s32.totalorder %s19, 1
      %p121 = scmp.ne.s32.totalorder %s116, %s118
      %p122 = scmp.eq.s32.totalorder %s19, 0
      %p123 = por %p121, %p122
      %p124 = scmp.ne.s32.totalorder %s116, %s118
      %p125 = scmp.eq.s32.totalorder %s24, 1
      %p126 = por %p124, %p125
      %p127 = scmp.ne.s32.totalorder %s118, %s119
      %p128 = scmp.eq.s32.totalorder %s24, 0
      %p129 = por %p127, %p128
      %p130 = scmp.ne.s32.totalorder %s118, %s119
      %p131 = scmp.eq.s32.totalorder %s25, 1
      %p132 = por %p130, %p131
      %p134 = scmp.ne.s32.totalorder %s119, %s133
      %p135 = scmp.eq.s32.totalorder %s25, 0
      %p136 = por %p134, %p135
      %s137 = ssub.s32 %s19, %s26
      %p138 = scmp.eq.s32.totalorder %s137, 0
      %s140 = sadd.s32 %s139, 1
      %s141 = scalar_select %p138, %s139, %s140
      %p144 = pneg %p138
      %p145 = scmp.eq.s32.totalorder %s19, 1
      %p146 = por %p144, %p145
      %p147 = scmp.ne.s32.totalorder %s139, %s142
      %p148 = scmp.eq.s32.totalorder %s19, 0
      %p149 = por %p147, %p148
      %p150 = scmp.ne.s32.totalorder %s139, %s142
      %p151 = scmp.eq.s32.totalorder %s24, 1
      %p152 = por %p150, %p151
      %p153 = scmp.ne.s32.totalorder %s142, %s143
      %p154 = scmp.eq.s32.totalorder %s24, 0
      %p155 = por %p153, %p154
      %p156 = scmp.ne.s32.totalorder %s142, %s143
      %p157 = scmp.eq.s32.totalorder %s25, 1
      %p158 = por %p156, %p157
      %p160 = scmp.ne.s32.totalorder %s143, %s159
      %p161 = scmp.eq.s32.totalorder %s25, 0
      %p162 = por %p160, %p161
      %p163 = scmp.le.s32.totalorder 1, %s19
      %p164 = scmp.lt.s32.totalorder %s19, 3
      %p165 = pnand %p163, %p164
      %p166 = pneg %p165
      // Predicated region
      $region9: #{tpu_custom_call.1} parent=5 // pred_check
        _
      $region10: #{tpu_custom_call.1} parent=5 // pred_check_branch
        %168 = sbr.rel (%p165) target = $region12
      $region11: #{tpu_custom_call.1} parent=5 // pred_region
        %s169 = ssub.s32 %s19, 1
        // Predicated region
        $region13: #{tpu_custom_call.1} parent=11 // pred_check
          %p170 = pneg %p66
        $region14: #{tpu_custom_call.1} parent=11 // pred_check_branch
          %172 = sbr.rel (%p170) target = $region16
        $region15: #{tpu_custom_call.1} parent=11 // pred_region
          %s174 = ssub.s32 256, 256
          %175 = vsyncadd [#allocation6], %s174
          %s176 = sshll.u32 [#allocation5], 4
          %s177 = int_to_ptr.vmem [resolvable:$true] %s176
          %182 = dma.hbm_to_vmem [thread:$0]  %s1, 256, %s177, [#allocation6], 64, 64, 4
        $region16: #{tpu_custom_call.1} parent=11 // pred_fallthru
          _
        // Predicated region
        $region17: #{tpu_custom_call.1} parent=11 // pred_check
          %p183 = pneg %p87
        $region18: #{tpu_custom_call.1} parent=11 // pred_check_branch
          %185 = sbr.rel (%p183) target = $region20
        $region19: #{tpu_custom_call.1} parent=11 // pred_region
          %s187 = ssub.s32 16, 16
          %188 = vsyncadd [#allocation6], %s187
          %s190 = sshll.u32 [#allocation7], 4
          %s191 = int_to_ptr.vmem [resolvable:$true] %s190
          %193 = dma.hbm_to_vmem [thread:$0]  %s2, 16, %s191, [#allocation6]
        $region20: #{tpu_custom_call.1} parent=11 // pred_fallthru
          _
        // Predicated region
        $region21: #{tpu_custom_call.1} parent=11 // pred_check
          %p194 = pneg %p108
        $region22: #{tpu_custom_call.1} parent=11 // pred_check_branch
          %196 = sbr.rel (%p194) target = $region24
        $region23: #{tpu_custom_call.1} parent=11 // pred_region
          %s198 = ssub.s32 256, 256
          %199 = vsyncadd [#allocation9], %s198
          %s200 = sshll.u32 [#allocation8], 4
          %s201 = int_to_ptr.vmem [resolvable:$true] %s200
          %206 = dma.hbm_to_vmem [thread:$0]  %s3, 256, %s201, [#allocation9], 64, 64, 4
        $region24: #{tpu_custom_call.1} parent=11 // pred_fallthru
          _
        // Predicated region
        $region25: #{tpu_custom_call.1} parent=11 // pred_check
          %p207 = pneg %p129
        $region26: #{tpu_custom_call.1} parent=11 // pred_check_branch
          %209 = sbr.rel (%p207) target = $region28
        $region27: #{tpu_custom_call.1} parent=11 // pred_region
          %s211 = ssub.s32 16, 16
          %212 = vsyncadd [#allocation9], %s211
          %s214 = sshll.u32 [#allocation10], 4
          %s215 = int_to_ptr.vmem [resolvable:$true] %s214
          %217 = dma.hbm_to_vmem [thread:$0]  %s4, 16, %s215, [#allocation9]
        $region28: #{tpu_custom_call.1} parent=11 // pred_fallthru
          _
      $region12: #{tpu_custom_call.1} parent=5 // pred_fallthru
        _
      %p218 = scmp.lt.s32.totalorder %s19, 2
      // Predicated region
      $region29: #{tpu_custom_call.1} parent=5 // pred_check
        %p219 = pneg %p218
      $region30: #{tpu_custom_call.1} parent=5 // pred_check_branch
        %221 = sbr.rel (%p219) target = $region32
      $region31: #{tpu_custom_call.1} parent=5 // pred_region
        // Predicated region
        $region33: #{tpu_custom_call.1} parent=31 // pred_check
          %p222 = pneg %p39
        $region34: #{tpu_custom_call.1} parent=31 // pred_check_branch
          %224 = sbr.rel (%p222) target = $region36
        $region35: #{tpu_custom_call.1} parent=31 // pred_region
          %s225 = sand.u32 %s29, 1
          %s226 = scalar_lea.sflag [#allocation3], %s225
          %s227 = sand.u32 %s29, 1
          %s228 = smul.addr %s227, 8
          %s229 = scalar_lea.vmem [#allocation2], %s228
          %s231 = ssub.s32 128, 128
          %232 = vsyncadd %s226, %s231
          %s233 = smul.addr %s19, 128
          %s234 = scalar_lea.hbm %s0, %s233
          %s236 = sshll.u32 %s229, 4
          %s237 = int_to_ptr.vmem [resolvable:$true] %s236
          %239 = dma.hbm_to_vmem [thread:$0]  %s234, 128, %s237, %s226
        $region36: #{tpu_custom_call.1} parent=31 // pred_fallthru
          _
      $region32: #{tpu_custom_call.1} parent=5 // pred_fallthru
        _
      %p240 = scmp.le.s32.totalorder 1, %s19
      %p241 = scmp.lt.s32.totalorder %s19, 3
      %p242 = pnand %p240, %p241
      %p243 = pneg %p242
      // Predicated region
      $region37: #{tpu_custom_call.1} parent=5 // pred_check
        _
      $region38: #{tpu_custom_call.1} parent=5 // pred_check_branch
        %245 = sbr.rel (%p242) target = $region40
      $region39: #{tpu_custom_call.1} parent=5 // pred_region
        %s246 = ssub.s32 %s19, 1
        %s247 = sand.u32 %s32, 1
        %s248 = scalar_lea.sflag [#allocation3], %s247
        %s249 = sand.u32 %s32, 1
        %s250 = smul.addr %s249, 8
        %s251 = scalar_lea.vmem [#allocation2], %s250
        // Predicated region
        $region41: #{tpu_custom_call.1} parent=39 // pred_check
          %p252 = pneg %p45
        $region42: #{tpu_custom_call.1} parent=39 // pred_check_branch
          %254 = sbr.rel (%p252) target = $region44
        $region43: #{tpu_custom_call.1} parent=39 // pred_region
          %255 = dma.done %s248, 128
        $region44: #{tpu_custom_call.1} parent=39 // pred_fallthru
          _
        // Predicated region
        $region45: #{tpu_custom_call.1} parent=39 // pred_check
          %p256 = pneg %p66
        $region46: #{tpu_custom_call.1} parent=39 // pred_check_branch
          %258 = sbr.rel (%p256) target = $region48
        $region47: #{tpu_custom_call.1} parent=39 // pred_region
          %259 = dma.done [#allocation6], 256
        $region48: #{tpu_custom_call.1} parent=39 // pred_fallthru
          _
        // Predicated region
        $region49: #{tpu_custom_call.1} parent=39 // pred_check
          %p260 = pneg %p87
        $region50: #{tpu_custom_call.1} parent=39 // pred_check_branch
          %262 = sbr.rel (%p260) target = $region52
        $region51: #{tpu_custom_call.1} parent=39 // pred_region
          %263 = dma.done [#allocation6], 16
        $region52: #{tpu_custom_call.1} parent=39 // pred_fallthru
          _
        // Predicated region
        $region53: #{tpu_custom_call.1} parent=39 // pred_check
          %p264 = pneg %p108
        $region54: #{tpu_custom_call.1} parent=39 // pred_check_branch
          %266 = sbr.rel (%p264) target = $region56
        $region55: #{tpu_custom_call.1} parent=39 // pred_region
          %267 = dma.done [#allocation9], 256
        $region56: #{tpu_custom_call.1} parent=39 // pred_fallthru
          _
        // Predicated region
        $region57: #{tpu_custom_call.1} parent=39 // pred_check
          %p268 = pneg %p129
        $region58: #{tpu_custom_call.1} parent=39 // pred_check_branch
          %270 = sbr.rel (%p268) target = $region60
        $region59: #{tpu_custom_call.1} parent=39 // pred_region
          %271 = dma.done [#allocation9], 16
        $region60: #{tpu_custom_call.1} parent=39 // pred_fallthru
          _
        %s272 = sand.u32 %s32, 1
        %s273 = scalar_lea.sflag [#allocation3], %s272
        %s274 = sand.u32 %s32, 1
        %s275 = smul.addr %s274, 8
        %s276 = scalar_lea.vmem [#allocation2], %s275
        %p277 = pneg %p45
        %p278 = pneg %p42
        %p279 = pneg %p66
        %p280 = pneg %p63
        %p281 = pneg %p87
        %p282 = pneg %p84
        %p283 = pneg %p108
        %p284 = pneg %p105
        %p285 = pneg %p129
        %p286 = pneg %p126
        %p287 = pneg %p155
        %p288 = pneg %p152
        %s289 = sand.u32 %s142, 1
        %s290 = scalar_lea.sflag [#allocation4], %s289
        %s291 = sand.u32 %s142, 1
        %s292 = smul.addr %s291, 8
        %s293 = scalar_lea.vmem [#allocation11], %s292
        %v295 = vld [vmem:[%s251] sm:$0xff]
        %v296 = vpack.c.bf16 %v295, %v295
        %v297 = vld [vmem:[#allocation5] sm:$0xf]
        %v298 = vld [vmem:[#allocation5 + $0x4] sm:$0xf]
        %v299 = vld [vmem:[#allocation5 + $0x8] sm:$0xf]
        %v300 = vld [vmem:[#allocation5 + $0xc] sm:$0xf]
        %v301 = vld [vmem:[#allocation7] sm:$0x1]
        %v303 = vlaneseq
        %v304 = vshrl.u32 %v303, 7
        %v305 = vsub.s32 0, %v304
        %v306 = vrot.slane %v301, %v305
        %v312 = vunpack.c.l.b16 %v297
        %v313 = vunpack.c.l.b16 %v298
        %v314 = vunpack.c.l.b16 %v299
        %v315 = vunpack.c.l.b16 %v300
        %v316 = vpack.c.b16 %v313, %v312
        %v317 = vpack.c.b16 %v315, %v314
        %vm320 = vcmask 261120
        %v322 = vsel %vm320, %v296, 0
        %324 = vmatprep.subr.bf16.mxu0 0
        %325 = vmatpush1.bf16.msra.mxu0 %v316
        %326 = vmatprep.subr.bf16.mxu0 0
        %327 = vmatpush1.bf16.msra.mxu0 %v317
        %328 = vmatprep.subr.bf16.mxu0 0
        %329 = vmatpush1.bf16.msra.mxu0 0
        %330 = vmatprep.subr.bf16.mxu0 0
        %331 = vmatpush1.bf16.msra.mxu0 0
        %332 = vmatprep.subr.bf16.mxu0 0
        %333 = vmatpush1.bf16.msra.mxu0 0
        %334 = vmatprep.subr.bf16.mxu0 0
        %335 = vmatpush1.bf16.msra.mxu0 0
        %336 = vmatprep.subr.bf16.mxu0 0
        %337 = vmatpush1.bf16.msra.mxu0 0
        %338 = vmatprep.subr.bf16.mxu0 0
        %339 = vmatpush1.bf16.msra.mxu0 0
        %340 = vmatprep.subr.bf16.mxu0 0
        %341 = vmatpush1.bf16.msra.mxu0 0
        %342 = vmatprep.subr.bf16.mxu0 0
        %343 = vmatpush1.bf16.msra.mxu0 0
        %344 = vmatprep.subr.bf16.mxu0 0
        %345 = vmatpush1.bf16.msra.mxu0 0
        %346 = vmatprep.subr.bf16.mxu0 0
        %347 = vmatpush1.bf16.msra.mxu0 0
        %348 = vmatprep.subr.bf16.mxu0 0
        %349 = vmatpush1.bf16.msra.mxu0 0
        %350 = vmatprep.subr.bf16.mxu0 0
        %351 = vmatpush1.bf16.msra.mxu0 0
        %352 = vmatprep.subr.bf16.mxu0 0
        %353 = vmatpush1.bf16.msra.mxu0 0
        %354 = vmatprep.subr.bf16.mxu0 0
        %355 = vmatpush1.bf16.msra.mxu0 0
        %356 = vmatprep.mubr.bf16.mxu0 0
        %357 = vmatmul.mubr.bf16.gmra.mrb[0].mxu0 %v322
        %v358 = vpop.f32.mrb[0].mxu0
        %v359 = vadd.f32 %v306, %v358
        %v360 = vpop.f32.mrb[0].mxu0
        %v361 = vpop.f32.mrb[0].mxu0
        %v362 = vpop.f32.mrb[0].mxu0
        %363 = vdwg.mxu0
        %365 = vrot.lane.b32.xlu0 %v359, 120
        %v366 = vpop.permute.xlu0 %365
        %368 = vrot.lane.b32.xlu0 %v359, 112
        %v369 = vpop.permute.xlu0 %368
        %371 = vrot.lane.b32.xlu0 %v359, 104
        %v372 = vpop.permute.xlu0 %371
        %v374 = vcombine.low %v359, %v369
        %v375 = vcombine.high %v359, %v369
        %v377 = vunpack.c.l.s4 1983009808
        %v378 = vunpack.c.0.s8 %v377
        %v379 = vlaneseq
        %v380 = vshrl.u32 %v379, 7
        %v381 = vsub.s32 %v378, %v380
        %v382 = vrot.slane %v374, %v381
        %v384 = vunpack.c.l.s4 1983009808
        %v385 = vunpack.c.0.s8 %v384
        %v386 = vlaneseq
        %v387 = vshrl.u32 %v386, 7
        %v388 = vsub.s32 %v385, %v387
        %v389 = vrot.slane %v375, %v388
        %v390 = vcombine.low %v366, %v372
        %v391 = vcombine.high %v366, %v372
        %v393 = vunpack.c.l.s4 1983009808
        %v394 = vunpack.c.0.s8 %v393
        %v395 = vlaneseq
        %v396 = vshrl.u32 %v395, 7
        %v397 = vsub.s32 %v394, %v396
        %v398 = vrot.slane %v390, %v397
        %v400 = vunpack.c.l.s4 1983009808
        %v401 = vunpack.c.0.s8 %v400
        %v402 = vlaneseq
        %v403 = vshrl.u32 %v402, 7
        %v404 = vsub.s32 %v401, %v403
        %v405 = vrot.slane %v391, %v404
        %v406 = vcombine.low %v382, %v398
        %v407 = vcombine.high %v382, %v398
        %v409 = vunpack.c.l.s4 1934713408
        %v410 = vunpack.c.0.s8 %v409
        %v411 = vlaneseq
        %v412 = vshrl.u32 %v411, 7
        %v413 = vsub.s32 %v410, %v412
        %v414 = vrot.slane %v406, %v413
        %v416 = vunpack.c.l.s4 1934713408
        %v417 = vunpack.c.0.s8 %v416
        %v418 = vlaneseq
        %v419 = vshrl.u32 %v418, 7
        %v420 = vsub.s32 %v417, %v419
        %v421 = vrot.slane %v407, %v420
        %v422 = vcombine.low %v389, %v405
        %v423 = vcombine.high %v389, %v405
        %v425 = vunpack.c.l.s4 1934713408
        %v426 = vunpack.c.0.s8 %v425
        %v427 = vlaneseq
        %v428 = vshrl.u32 %v427, 7
        %v429 = vsub.s32 %v426, %v428
        %v430 = vrot.slane %v422, %v429
        %v432 = vunpack.c.l.s4 1934713408
        %v433 = vunpack.c.0.s8 %v432
        %v434 = vlaneseq
        %v435 = vshrl.u32 %v434, 7
        %v436 = vsub.s32 %v433, %v435
        %v437 = vrot.slane %v423, %v436
        %v438 = vcombine.high %v414, 0.0
        %v439 = vcombine.high %v421, 0.0
        %v440 = vcombine.high %v430, 0.0
        %v441 = vcombine.high %v437, 0.0
        %v442 = vcombine.low %v414, %v421
        %v444 = vunpack.c.l.s4 1983009808
        %v445 = vunpack.c.0.s8 %v444
        %v446 = vlaneseq
        %v447 = vshrl.u32 %v446, 7
        %v448 = vsub.s32 %v445, %v447
        %v449 = vrot.slane %v442, %v448
        %v450 = vcombine.low %v438, %v439
        %v452 = vunpack.c.l.s4 1983009808
        %v453 = vunpack.c.0.s8 %v452
        %v454 = vlaneseq
        %v455 = vshrl.u32 %v454, 7
        %v456 = vsub.s32 %v453, %v455
        %v457 = vrot.slane %v450, %v456
        %v458 = vcombine.low %v430, %v437
        %v460 = vunpack.c.l.s4 1983009808
        %v461 = vunpack.c.0.s8 %v460
        %v462 = vlaneseq
        %v463 = vshrl.u32 %v462, 7
        %v464 = vsub.s32 %v461, %v463
        %v465 = vrot.slane %v458, %v464
        %v466 = vcombine.low %v440, %v441
        %v468 = vunpack.c.l.s4 1983009808
        %v469 = vunpack.c.0.s8 %v468
        %v470 = vlaneseq
        %v471 = vshrl.u32 %v470, 7
        %v472 = vsub.s32 %v469, %v471
        %v473 = vrot.slane %v466, %v472
        %v474 = vcombine.low %v449, %v457
        %v475 = vcombine.high %v449, %v457
        %v477 = vunpack.c.l.s4 1934713408
        %v478 = vunpack.c.0.s8 %v477
        %v479 = vlaneseq
        %v480 = vshrl.u32 %v479, 7
        %v481 = vsub.s32 %v478, %v480
        %v482 = vrot.slane %v474, %v481
        %v484 = vunpack.c.l.s4 1934713408
        %v485 = vunpack.c.0.s8 %v484
        %v486 = vlaneseq
        %v487 = vshrl.u32 %v486, 7
        %v488 = vsub.s32 %v485, %v487
        %v489 = vrot.slane %v475, %v488
        %v490 = vcombine.low %v465, %v473
        %v491 = vcombine.high %v465, %v473
        %v493 = vunpack.c.l.s4 1934713408
        %v494 = vunpack.c.0.s8 %v493
        %v495 = vlaneseq
        %v496 = vshrl.u32 %v495, 7
        %v497 = vsub.s32 %v494, %v496
        %v498 = vrot.slane %v490, %v497
        %v500 = vunpack.c.l.s4 1934713408
        %v501 = vunpack.c.0.s8 %v500
        %v502 = vlaneseq
        %v503 = vshrl.u32 %v502, 7
        %v504 = vsub.s32 %v501, %v503
        %v505 = vrot.slane %v491, %v504
        %v506 = vcombine.low %v482, %v498
        %v507 = vcombine.high %v482, %v498
        %v508 = vcombine.low %v489, %v505
        %v509 = vcombine.high %v489, %v505
        %v510 = vpack.c.bf16 %v506, %v506
        %v511 = vpack.c.bf16 %v507, %v507
        %v512 = vpack.c.bf16 %v508, %v508
        %v513 = vpack.c.bf16 %v509, %v509
        %514 = vrot.lane.b32.xlu0 %v359, 96
        %v515 = vpop.permute.xlu0 %514
        %516 = vrot.lane.b32.xlu0 %v366, 96
        %v517 = vpop.permute.xlu0 %516
        %518 = vrot.lane.b32.xlu0 %v369, 96
        %v519 = vpop.permute.xlu0 %518
        %520 = vrot.lane.b32.xlu0 %v372, 96
        %v521 = vpop.permute.xlu0 %520
        %v526 = vcombine.low %v515, %v519
        %v527 = vcombine.high %v515, %v519
        %v529 = vunpack.c.l.s4 1983009808
        %v530 = vunpack.c.0.s8 %v529
        %v531 = vlaneseq
        %v532 = vshrl.u32 %v531, 7
        %v533 = vsub.s32 %v530, %v532
        %v534 = vrot.slane %v526, %v533
        %v536 = vunpack.c.l.s4 1983009808
        %v537 = vunpack.c.0.s8 %v536
        %v538 = vlaneseq
        %v539 = vshrl.u32 %v538, 7
        %v540 = vsub.s32 %v537, %v539
        %v541 = vrot.slane %v527, %v540
        %v542 = vcombine.low %v517, %v521
        %v543 = vcombine.high %v517, %v521
        %v545 = vunpack.c.l.s4 1983009808
        %v546 = vunpack.c.0.s8 %v545
        %v547 = vlaneseq
        %v548 = vshrl.u32 %v547, 7
        %v549 = vsub.s32 %v546, %v548
        %v550 = vrot.slane %v542, %v549
        %v552 = vunpack.c.l.s4 1983009808
        %v553 = vunpack.c.0.s8 %v552
        %v554 = vlaneseq
        %v555 = vshrl.u32 %v554, 7
        %v556 = vsub.s32 %v553, %v555
        %v557 = vrot.slane %v543, %v556
        %v558 = vcombine.low %v534, %v550
        %v559 = vcombine.high %v534, %v550
        %v561 = vunpack.c.l.s4 1934713408
        %v562 = vunpack.c.0.s8 %v561
        %v563 = vlaneseq
        %v564 = vshrl.u32 %v563, 7
        %v565 = vsub.s32 %v562, %v564
        %v566 = vrot.slane %v558, %v565
        %v568 = vunpack.c.l.s4 1934713408
        %v569 = vunpack.c.0.s8 %v568
        %v570 = vlaneseq
        %v571 = vshrl.u32 %v570, 7
        %v572 = vsub.s32 %v569, %v571
        %v573 = vrot.slane %v559, %v572
        %v574 = vcombine.low %v541, %v557
        %v575 = vcombine.high %v541, %v557
        %v577 = vunpack.c.l.s4 1934713408
        %v578 = vunpack.c.0.s8 %v577
        %v579 = vlaneseq
        %v580 = vshrl.u32 %v579, 7
        %v581 = vsub.s32 %v578, %v580
        %v582 = vrot.slane %v574, %v581
        %v584 = vunpack.c.l.s4 1934713408
        %v585 = vunpack.c.0.s8 %v584
        %v586 = vlaneseq
        %v587 = vshrl.u32 %v586, 7
        %v588 = vsub.s32 %v585, %v587
        %v589 = vrot.slane %v575, %v588
        %v590 = vcombine.high %v566, 0.0
        %v591 = vcombine.high %v573, 0.0
        %v592 = vcombine.high %v582, 0.0
        %v593 = vcombine.high %v589, 0.0
        %v594 = vcombine.low %v566, %v573
        %v596 = vunpack.c.l.s4 1983009808
        %v597 = vunpack.c.0.s8 %v596
        %v598 = vlaneseq
        %v599 = vshrl.u32 %v598, 7
        %v600 = vsub.s32 %v597, %v599
        %v601 = vrot.slane %v594, %v600
        %v602 = vcombine.low %v590, %v591
        %v604 = vunpack.c.l.s4 1983009808
        %v605 = vunpack.c.0.s8 %v604
        %v606 = vlaneseq
        %v607 = vshrl.u32 %v606, 7
        %v608 = vsub.s32 %v605, %v607
        %v609 = vrot.slane %v602, %v608
        %v610 = vcombine.low %v582, %v589
        %v612 = vunpack.c.l.s4 1983009808
        %v613 = vunpack.c.0.s8 %v612
        %v614 = vlaneseq
        %v615 = vshrl.u32 %v614, 7
        %v616 = vsub.s32 %v613, %v615
        %v617 = vrot.slane %v610, %v616
        %v618 = vcombine.low %v592, %v593
        %v620 = vunpack.c.l.s4 1983009808
        %v621 = vunpack.c.0.s8 %v620
        %v622 = vlaneseq
        %v623 = vshrl.u32 %v622, 7
        %v624 = vsub.s32 %v621, %v623
        %v625 = vrot.slane %v618, %v624
        %v626 = vcombine.low %v601, %v609
        %v627 = vcombine.high %v601, %v609
        %v629 = vunpack.c.l.s4 1934713408
        %v630 = vunpack.c.0.s8 %v629
        %v631 = vlaneseq
        %v632 = vshrl.u32 %v631, 7
        %v633 = vsub.s32 %v630, %v632
        %v634 = vrot.slane %v626, %v633
        %v636 = vunpack.c.l.s4 1934713408
        %v637 = vunpack.c.0.s8 %v636
        %v638 = vlaneseq
        %v639 = vshrl.u32 %v638, 7
        %v640 = vsub.s32 %v637, %v639
        %v641 = vrot.slane %v627, %v640
        %v642 = vcombine.low %v617, %v625
        %v643 = vcombine.high %v617, %v625
        %v645 = vunpack.c.l.s4 1934713408
        %v646 = vunpack.c.0.s8 %v645
        %v647 = vlaneseq
        %v648 = vshrl.u32 %v647, 7
        %v649 = vsub.s32 %v646, %v648
        %v650 = vrot.slane %v642, %v649
        %v652 = vunpack.c.l.s4 1934713408
        %v653 = vunpack.c.0.s8 %v652
        %v654 = vlaneseq
        %v655 = vshrl.u32 %v654, 7
        %v656 = vsub.s32 %v653, %v655
        %v657 = vrot.slane %v643, %v656
        %v658 = vcombine.low %v634, %v650
        %v659 = vcombine.high %v634, %v650
        %v660 = vcombine.low %v641, %v657
        %v661 = vcombine.high %v641, %v657
        %v662 = vpack.c.bf16 %v658, %v658
        %v663 = vpack.c.bf16 %v659, %v659
        %v664 = vpack.c.bf16 %v660, %v660
        %v665 = vpack.c.bf16 %v661, %v661
        %666 = vrot.lane.b32.xlu0 %v359, 64
        %v667 = vpop.permute.xlu0 %666
        %668 = vrot.lane.b32.xlu0 %v366, 64
        %v669 = vpop.permute.xlu0 %668
        %670 = vrot.lane.b32.xlu0 %v369, 64
        %v671 = vpop.permute.xlu0 %670
        %672 = vrot.lane.b32.xlu0 %v372, 64
        %v673 = vpop.permute.xlu0 %672
        %v678 = vcombine.low %v667, %v671
        %v679 = vcombine.high %v667, %v671
        %v681 = vunpack.c.l.s4 1983009808
        %v682 = vunpack.c.0.s8 %v681
        %v683 = vlaneseq
        %v684 = vshrl.u32 %v683, 7
        %v685 = vsub.s32 %v682, %v684
        %v686 = vrot.slane %v678, %v685
        %v688 = vunpack.c.l.s4 1983009808
        %v689 = vunpack.c.0.s8 %v688
        %v690 = vlaneseq
        %v691 = vshrl.u32 %v690, 7
        %v692 = vsub.s32 %v689, %v691
        %v693 = vrot.slane %v679, %v692
        %v694 = vcombine.low %v669, %v673
        %v695 = vcombine.high %v669, %v673
        %v697 = vunpack.c.l.s4 1983009808
        %v698 = vunpack.c.0.s8 %v697
        %v699 = vlaneseq
        %v700 = vshrl.u32 %v699, 7
        %v701 = vsub.s32 %v698, %v700
        %v702 = vrot.slane %v694, %v701
        %v704 = vunpack.c.l.s4 1983009808
        %v705 = vunpack.c.0.s8 %v704
        %v706 = vlaneseq
        %v707 = vshrl.u32 %v706, 7
        %v708 = vsub.s32 %v705, %v707
        %v709 = vrot.slane %v695, %v708
        %v710 = vcombine.low %v686, %v702
        %v711 = vcombine.high %v686, %v702
        %v713 = vunpack.c.l.s4 1934713408
        %v714 = vunpack.c.0.s8 %v713
        %v715 = vlaneseq
        %v716 = vshrl.u32 %v715, 7
        %v717 = vsub.s32 %v714, %v716
        %v718 = vrot.slane %v710, %v717
        %v720 = vunpack.c.l.s4 1934713408
        %v721 = vunpack.c.0.s8 %v720
        %v722 = vlaneseq
        %v723 = vshrl.u32 %v722, 7
        %v724 = vsub.s32 %v721, %v723
        %v725 = vrot.slane %v711, %v724
        %v726 = vcombine.low %v693, %v709
        %v727 = vcombine.high %v693, %v709
        %v729 = vunpack.c.l.s4 1934713408
        %v730 = vunpack.c.0.s8 %v729
        %v731 = vlaneseq
        %v732 = vshrl.u32 %v731, 7
        %v733 = vsub.s32 %v730, %v732
        %v734 = vrot.slane %v726, %v733
        %v736 = vunpack.c.l.s4 1934713408
        %v737 = vunpack.c.0.s8 %v736
        %v738 = vlaneseq
        %v739 = vshrl.u32 %v738, 7
        %v740 = vsub.s32 %v737, %v739
        %v741 = vrot.slane %v727, %v740
        %v742 = vcombine.high %v718, 0.0
        %v743 = vcombine.high %v725, 0.0
        %v744 = vcombine.high %v734, 0.0
        %v745 = vcombine.high %v741, 0.0
        %v746 = vcombine.low %v718, %v725
        %v748 = vunpack.c.l.s4 1983009808
        %v749 = vunpack.c.0.s8 %v748
        %v750 = vlaneseq
        %v751 = vshrl.u32 %v750, 7
        %v752 = vsub.s32 %v749, %v751
        %v753 = vrot.slane %v746, %v752
        %v754 = vcombine.low %v742, %v743
        %v756 = vunpack.c.l.s4 1983009808
        %v757 = vunpack.c.0.s8 %v756
        %v758 = vlaneseq
        %v759 = vshrl.u32 %v758, 7
        %v760 = vsub.s32 %v757, %v759
        %v761 = vrot.slane %v754, %v760
        %v762 = vcombine.low %v734, %v741
        %v764 = vunpack.c.l.s4 1983009808
        %v765 = vunpack.c.0.s8 %v764
        %v766 = vlaneseq
        %v767 = vshrl.u32 %v766, 7
        %v768 = vsub.s32 %v765, %v767
        %v769 = vrot.slane %v762, %v768
        %v770 = vcombine.low %v744, %v745
        %v772 = vunpack.c.l.s4 1983009808
        %v773 = vunpack.c.0.s8 %v772
        %v774 = vlaneseq
        %v775 = vshrl.u32 %v774, 7
        %v776 = vsub.s32 %v773, %v775
        %v777 = vrot.slane %v770, %v776
        %v778 = vcombine.low %v753, %v761
        %v779 = vcombine.high %v753, %v761
        %v781 = vunpack.c.l.s4 1934713408
        %v782 = vunpack.c.0.s8 %v781
        %v783 = vlaneseq
        %v784 = vshrl.u32 %v783, 7
        %v785 = vsub.s32 %v782, %v784
        %v786 = vrot.slane %v778, %v785
        %v788 = vunpack.c.l.s4 1934713408
        %v789 = vunpack.c.0.s8 %v788
        %v790 = vlaneseq
        %v791 = vshrl.u32 %v790, 7
        %v792 = vsub.s32 %v789, %v791
        %v793 = vrot.slane %v779, %v792
        %v794 = vcombine.low %v769, %v777
        %v795 = vcombine.high %v769, %v777
        %v797 = vunpack.c.l.s4 1934713408
        %v798 = vunpack.c.0.s8 %v797
        %v799 = vlaneseq
        %v800 = vshrl.u32 %v799, 7
        %v801 = vsub.s32 %v798, %v800
        %v802 = vrot.slane %v794, %v801
        %v804 = vunpack.c.l.s4 1934713408
        %v805 = vunpack.c.0.s8 %v804
        %v806 = vlaneseq
        %v807 = vshrl.u32 %v806, 7
        %v808 = vsub.s32 %v805, %v807
        %v809 = vrot.slane %v795, %v808
        %v810 = vcombine.low %v786, %v802
        %v811 = vcombine.high %v786, %v802
        %v812 = vcombine.low %v793, %v809
        %v813 = vcombine.high %v793, %v809
        %v814 = vpack.c.bf16 %v810, %v810
        %v815 = vpack.c.bf16 %v811, %v811
        %v816 = vpack.c.bf16 %v812, %v812
        %v817 = vpack.c.bf16 %v813, %v813
        %vm818 = vcmask 64512
        %v820 = vsel %vm818, %v510, 0
        %v823 = vsel %vm818, %v662, 0
        %825 = vmatprep.subr.bf16.mxu0 0
        %826 = vmatpush1.bf16.xpose.msra.mxu0 %v823
        %827 = vmatprep.subr.bf16.mxu0 0
        %828 = vmatpush1.bf16.xpose.msra.mxu0 0
        %829 = vmatprep.subr.bf16.mxu0 0
        %830 = vmatpush1.bf16.xpose.msra.mxu0 0
        %831 = vmatprep.subr.bf16.mxu0 0
        %832 = vmatpush1.bf16.xpose.msra.mxu0 0
        %833 = vmatprep.subr.bf16.mxu0 0
        %834 = vmatpush1.bf16.xpose.msra.mxu0 0
        %835 = vmatprep.subr.bf16.mxu0 0
        %836 = vmatpush1.bf16.xpose.msra.mxu0 0
        %837 = vmatprep.subr.bf16.mxu0 0
        %838 = vmatpush1.bf16.xpose.msra.mxu0 0
        %839 = vmatprep.subr.bf16.mxu0 0
        %840 = vmatpush1.bf16.xpose.msra.mxu0 0
        %841 = vmatprep.subr.bf16.mxu0 0
        %842 = vmatpush1.bf16.xpose.msra.mxu0 0
        %843 = vmatprep.subr.bf16.mxu0 0
        %844 = vmatpush1.bf16.xpose.msra.mxu0 0
        %845 = vmatprep.subr.bf16.mxu0 0
        %846 = vmatpush1.bf16.xpose.msra.mxu0 0
        %847 = vmatprep.subr.bf16.mxu0 0
        %848 = vmatpush1.bf16.xpose.msra.mxu0 0
        %849 = vmatprep.subr.bf16.mxu0 0
        %850 = vmatpush1.bf16.xpose.msra.mxu0 0
        %851 = vmatprep.subr.bf16.mxu0 0
        %852 = vmatpush1.bf16.xpose.msra.mxu0 0
        %853 = vmatprep.subr.bf16.mxu0 0
        %854 = vmatpush1.bf16.xpose.msra.mxu0 0
        %855 = vmatprep.subr.bf16.mxu0 0
        %856 = vmatpush1.bf16.xpose.msra.mxu0 0
        %857 = vmatprep.mubr.bf16.mxu0 0
        %858 = vmatmul.mubr.bf16.gmra.mrb[0].mxu0 %v820
        %v859 = vpop.f32.mrb[0].mxu0
        %v860 = vadd.f32 0.0, %v859
        %v861 = vpop.f32.mrb[0].mxu0
        %v862 = vpop.f32.mrb[0].mxu0
        %v863 = vpop.f32.mrb[0].mxu0
        %864 = vdwg.mxu0
        %v866 = vsel %vm818, %v511, 0
        %v869 = vsel %vm818, %v663, 0
        %871 = vmatprep.subr.bf16.mxu0 0
        %872 = vmatpush1.bf16.xpose.msra.mxu0 %v869
        %873 = vmatprep.subr.bf16.mxu0 0
        %874 = vmatpush1.bf16.xpose.msra.mxu0 0
        %875 = vmatprep.subr.bf16.mxu0 0
        %876 = vmatpush1.bf16.xpose.msra.mxu0 0
        %877 = vmatprep.subr.bf16.mxu0 0
        %878 = vmatpush1.bf16.xpose.msra.mxu0 0
        %879 = vmatprep.subr.bf16.mxu0 0
        %880 = vmatpush1.bf16.xpose.msra.mxu0 0
        %881 = vmatprep.subr.bf16.mxu0 0
        %882 = vmatpush1.bf16.xpose.msra.mxu0 0
        %883 = vmatprep.subr.bf16.mxu0 0
        %884 = vmatpush1.bf16.xpose.msra.mxu0 0
        %885 = vmatprep.subr.bf16.mxu0 0
        %886 = vmatpush1.bf16.xpose.msra.mxu0 0
        %887 = vmatprep.subr.bf16.mxu0 0
        %888 = vmatpush1.bf16.xpose.msra.mxu0 0
        %889 = vmatprep.subr.bf16.mxu0 0
        %890 = vmatpush1.bf16.xpose.msra.mxu0 0
        %891 = vmatprep.subr.bf16.mxu0 0
        %892 = vmatpush1.bf16.xpose.msra.mxu0 0
        %893 = vmatprep.subr.bf16.mxu0 0
        %894 = vmatpush1.bf16.xpose.msra.mxu0 0
        %895 = vmatprep.subr.bf16.mxu0 0
        %896 = vmatpush1.bf16.xpose.msra.mxu0 0
        %897 = vmatprep.subr.bf16.mxu0 0
        %898 = vmatpush1.bf16.xpose.msra.mxu0 0
        %899 = vmatprep.subr.bf16.mxu0 0
        %900 = vmatpush1.bf16.xpose.msra.mxu0 0
        %901 = vmatprep.subr.bf16.mxu0 0
        %902 = vmatpush1.bf16.xpose.msra.mxu0 0
        %903 = vmatprep.mubr.bf16.mxu0 0
        %904 = vmatmul.mubr.bf16.gmra.mrb[0].mxu0 %v866
        %v905 = vpop.f32.mrb[0].mxu0
        %v906 = vadd.f32 0.0, %v905
        %v907 = vpop.f32.mrb[0].mxu0
        %v908 = vpop.f32.mrb[0].mxu0
        %v909 = vpop.f32.mrb[0].mxu0
        %910 = vdwg.mxu0
        %v912 = vsel %vm818, %v512, 0
        %v915 = vsel %vm818, %v664, 0
        %917 = vmatprep.subr.bf16.mxu0 0
        %918 = vmatpush1.bf16.xpose.msra.mxu0 %v915
        %919 = vmatprep.subr.bf16.mxu0 0
        %920 = vmatpush1.bf16.xpose.msra.mxu0 0
        %921 = vmatprep.subr.bf16.mxu0 0
        %922 = vmatpush1.bf16.xpose.msra.mxu0 0
        %923 = vmatprep.subr.bf16.mxu0 0
        %924 = vmatpush1.bf16.xpose.msra.mxu0 0
        %925 = vmatprep.subr.bf16.mxu0 0
        %926 = vmatpush1.bf16.xpose.msra.mxu0 0
        %927 = vmatprep.subr.bf16.mxu0 0
        %928 = vmatpush1.bf16.xpose.msra.mxu0 0
        %929 = vmatprep.subr.bf16.mxu0 0
        %930 = vmatpush1.bf16.xpose.msra.mxu0 0
        %931 = vmatprep.subr.bf16.mxu0 0
        %932 = vmatpush1.bf16.xpose.msra.mxu0 0
        %933 = vmatprep.subr.bf16.mxu0 0
        %934 = vmatpush1.bf16.xpose.msra.mxu0 0
        %935 = vmatprep.subr.bf16.mxu0 0
        %936 = vmatpush1.bf16.xpose.msra.mxu0 0
        %937 = vmatprep.subr.bf16.mxu0 0
        %938 = vmatpush1.bf16.xpose.msra.mxu0 0
        %939 = vmatprep.subr.bf16.mxu0 0
        %940 = vmatpush1.bf16.xpose.msra.mxu0 0
        %941 = vmatprep.subr.bf16.mxu0 0
        %942 = vmatpush1.bf16.xpose.msra.mxu0 0
        %943 = vmatprep.subr.bf16.mxu0 0
        %944 = vmatpush1.bf16.xpose.msra.mxu0 0
        %945 = vmatprep.subr.bf16.mxu0 0
        %946 = vmatpush1.bf16.xpose.msra.mxu0 0
        %947 = vmatprep.subr.bf16.mxu0 0
        %948 = vmatpush1.bf16.xpose.msra.mxu0 0
        %949 = vmatprep.mubr.bf16.mxu0 0
        %950 = vmatmul.mubr.bf16.gmra.mrb[0].mxu0 %v912
        %v951 = vpop.f32.mrb[0].mxu0
        %v952 = vadd.f32 0.0, %v951
        %v953 = vpop.f32.mrb[0].mxu0
        %v954 = vpop.f32.mrb[0].mxu0
        %v955 = vpop.f32.mrb[0].mxu0
        %956 = vdwg.mxu0
        %v958 = vsel %vm818, %v513, 0
        %v961 = vsel %vm818, %v665, 0
        %963 = vmatprep.subr.bf16.mxu0 0
        %964 = vmatpush1.bf16.xpose.msra.mxu0 %v961
        %965 = vmatprep.subr.bf16.mxu0 0
        %966 = vmatpush1.bf16.xpose.msra.mxu0 0
        %967 = vmatprep.subr.bf16.mxu0 0
        %968 = vmatpush1.bf16.xpose.msra.mxu0 0
        %969 = vmatprep.subr.bf16.mxu0 0
        %970 = vmatpush1.bf16.xpose.msra.mxu0 0
        %971 = vmatprep.subr.bf16.mxu0 0
        %972 = vmatpush1.bf16.xpose.msra.mxu0 0
        %973 = vmatprep.subr.bf16.mxu0 0
        %974 = vmatpush1.bf16.xpose.msra.mxu0 0
        %975 = vmatprep.subr.bf16.mxu0 0
        %976 = vmatpush1.bf16.xpose.msra.mxu0 0
        %977 = vmatprep.subr.bf16.mxu0 0
        %978 = vmatpush1.bf16.xpose.msra.mxu0 0
        %979 = vmatprep.subr.bf16.mxu0 0
        %980 = vmatpush1.bf16.xpose.msra.mxu0 0
        %981 = vmatprep.subr.bf16.mxu0 0
        %982 = vmatpush1.bf16.xpose.msra.mxu0 0
        %983 = vmatprep.subr.bf16.mxu0 0
        %984 = vmatpush1.bf16.xpose.msra.mxu0 0
        %985 = vmatprep.subr.bf16.mxu0 0
        %986 = vmatpush1.bf16.xpose.msra.mxu0 0
        %987 = vmatprep.subr.bf16.mxu0 0
        %988 = vmatpush1.bf16.xpose.msra.mxu0 0
        %989 = vmatprep.subr.bf16.mxu0 0
        %990 = vmatpush1.bf16.xpose.msra.mxu0 0
        %991 = vmatprep.subr.bf16.mxu0 0
        %992 = vmatpush1.bf16.xpose.msra.mxu0 0
        %993 = vmatprep.subr.bf16.mxu0 0
        %994 = vmatpush1.bf16.xpose.msra.mxu0 0
        %995 = vmatprep.mubr.bf16.mxu0 0
        %996 = vmatmul.mubr.bf16.gmra.mrb[0].mxu0 %v958
        %v997 = vpop.f32.mrb[0].mxu0
        %v998 = vadd.f32 0.0, %v997
        %v999 = vpop.f32.mrb[0].mxu0
        %v1000 = vpop.f32.mrb[0].mxu0
        %v1001 = vpop.f32.mrb[0].mxu0
        %1002 = vdwg.mxu0
        %v1003 = vsel %vm818, %v860, -inf
        %1004 = vmax.xlane.f32.xlu0 %v1003
        %v1005 = vpop.xlane.xlu0 %1004
        %v1006 = vsel %vm818, %v906, -inf
        %1007 = vmax.xlane.f32.xlu0 %v1006
        %v1008 = vpop.xlane.xlu0 %1007
        %v1009 = vsel %vm818, %v952, -inf
        %1010 = vmax.xlane.f32.xlu0 %v1009
        %v1011 = vpop.xlane.xlu0 %1010
        %v1012 = vsel %vm818, %v998, -inf
        %1013 = vmax.xlane.f32.xlu0 %v1012
        %v1014 = vpop.xlane.xlu0 %1013
        %v1015 = vsub.f32 %v860, %v1005
        %v1016 = vsub.f32 %v906, %v1008
        %v1017 = vsub.f32 %v952, %v1011
        %v1018 = vsub.f32 %v998, %v1014
        %v1019 = vmul.f32 %v1015, 1.442695
        %v1020 = vpow.pop %v1019
        %v1021 = vmul.f32 %v1016, 1.442695
        %v1022 = vpow.pop %v1021
        %v1023 = vmul.f32 %v1017, 1.442695
        %v1024 = vpow.pop %v1023
        %v1025 = vmul.f32 %v1018, 1.442695
        %v1026 = vpow.pop %v1025
        %v1027 = vsel %vm818, %v1020, 0.0
        %1028 = vadd.xlane.f32.xlu0 %v1027
        %v1029 = vpop.xlane.xlu0 %1028
        %v1030 = vsel %vm818, %v1022, 0.0
        %1031 = vadd.xlane.f32.xlu0 %v1030
        %v1032 = vpop.xlane.xlu0 %1031
        %v1033 = vsel %vm818, %v1024, 0.0
        %1034 = vadd.xlane.f32.xlu0 %v1033
        %v1035 = vpop.xlane.xlu0 %1034
        %v1036 = vsel %vm818, %v1026, 0.0
        %1037 = vadd.xlane.f32.xlu0 %v1036
        %v1038 = vpop.xlane.xlu0 %1037
        %v1039 = vrcp.pop %v1029
        %v1040 = vrcp.pop %v1032
        %v1041 = vrcp.pop %v1035
        %v1042 = vrcp.pop %v1038
        %v1043 = vmul.f32 %v1020, %v1039
        %v1044 = vmul.f32 %v1022, %v1040
        %v1045 = vmul.f32 %v1024, %v1041
        %v1046 = vmul.f32 %v1026, %v1042
        %v1047 = vpack.c.bf16 %v1043, %v1043
        %v1048 = vpack.c.bf16 %v1044, %v1044
        %v1049 = vpack.c.bf16 %v1045, %v1045
        %v1050 = vpack.c.bf16 %v1046, %v1046
        %v1052 = vsel %vm818, %v1047, 0
        %vm1054 = vcmask 1043456
        %v1056 = vsel %vm1054, %v814, 0
        %1058 = vmatprep.subr.bf16.mxu0 0
        %1059 = vmatpush1.bf16.msra.mxu0 %v1056
        %1060 = vmatprep.subr.bf16.mxu0 0
        %1061 = vmatpush1.bf16.msra.mxu0 0
        %1062 = vmatprep.subr.bf16.mxu0 0
        %1063 = vmatpush1.bf16.msra.mxu0 0
        %1064 = vmatprep.subr.bf16.mxu0 0
        %1065 = vmatpush1.bf16.msra.mxu0 0
        %1066 = vmatprep.subr.bf16.mxu0 0
        %1067 = vmatpush1.bf16.msra.mxu0 0
        %1068 = vmatprep.subr.bf16.mxu0 0
        %1069 = vmatpush1.bf16.msra.mxu0 0
        %1070 = vmatprep.subr.bf16.mxu0 0
        %1071 = vmatpush1.bf16.msra.mxu0 0
        %1072 = vmatprep.subr.bf16.mxu0 0
        %1073 = vmatpush1.bf16.msra.mxu0 0
        %1074 = vmatprep.subr.bf16.mxu0 0
        %1075 = vmatpush1.bf16.msra.mxu0 0
        %1076 = vmatprep.subr.bf16.mxu0 0
        %1077 = vmatpush1.bf16.msra.mxu0 0
        %1078 = vmatprep.subr.bf16.mxu0 0
        %1079 = vmatpush1.bf16.msra.mxu0 0
        %1080 = vmatprep.subr.bf16.mxu0 0
        %1081 = vmatpush1.bf16.msra.mxu0 0
        %1082 = vmatprep.subr.bf16.mxu0 0
        %1083 = vmatpush1.bf16.msra.mxu0 0
        %1084 = vmatprep.subr.bf16.mxu0 0
        %1085 = vmatpush1.bf16.msra.mxu0 0
        %1086 = vmatprep.subr.bf16.mxu0 0
        %1087 = vmatpush1.bf16.msra.mxu0 0
        %1088 = vmatprep.subr.bf16.mxu0 0
        %1089 = vmatpush1.bf16.msra.mxu0 0
        %1090 = vmatprep.mubr.bf16.mxu0 0
        %1091 = vmatmul.mubr.bf16.gmra.mrb[0].mxu0 %v1052
        %v1092 = vpop.f32.mrb[0].mxu0
        %v1093 = vadd.f32 0.0, %v1092
        %v1094 = vpop.f32.mrb[0].mxu0
        %v1095 = vpop.f32.mrb[0].mxu0
        %v1096 = vpop.f32.mrb[0].mxu0
        %1097 = vdwg.mxu0
        %v1099 = vsel %vm818, %v1048, 0
        %v1102 = vsel %vm1054, %v815, 0
        %1104 = vmatprep.subr.bf16.mxu0 0
        %1105 = vmatpush1.bf16.msra.mxu0 %v1102
        %1106 = vmatprep.subr.bf16.mxu0 0
        %1107 = vmatpush1.bf16.msra.mxu0 0
        %1108 = vmatprep.subr.bf16.mxu0 0
        %1109 = vmatpush1.bf16.msra.mxu0 0
        %1110 = vmatprep.subr.bf16.mxu0 0
        %1111 = vmatpush1.bf16.msra.mxu0 0
        %1112 = vmatprep.subr.bf16.mxu0 0
        %1113 = vmatpush1.bf16.msra.mxu0 0
        %1114 = vmatprep.subr.bf16.mxu0 0
        %1115 = vmatpush1.bf16.msra.mxu0 0
        %1116 = vmatprep.subr.bf16.mxu0 0
        %1117 = vmatpush1.bf16.msra.mxu0 0
        %1118 = vmatprep.subr.bf16.mxu0 0
        %1119 = vmatpush1.bf16.msra.mxu0 0
        %1120 = vmatprep.subr.bf16.mxu0 0
        %1121 = vmatpush1.bf16.msra.mxu0 0
        %1122 = vmatprep.subr.bf16.mxu0 0
        %1123 = vmatpush1.bf16.msra.mxu0 0
        %1124 = vmatprep.subr.bf16.mxu0 0
        %1125 = vmatpush1.bf16.msra.mxu0 0
        %1126 = vmatprep.subr.bf16.mxu0 0
        %1127 = vmatpush1.bf16.msra.mxu0 0
        %1128 = vmatprep.subr.bf16.mxu0 0
        %1129 = vmatpush1.bf16.msra.mxu0 0
        %1130 = vmatprep.subr.bf16.mxu0 0
        %1131 = vmatpush1.bf16.msra.mxu0 0
        %1132 = vmatprep.subr.bf16.mxu0 0
        %1133 = vmatpush1.bf16.msra.mxu0 0
        %1134 = vmatprep.subr.bf16.mxu0 0
        %1135 = vmatpush1.bf16.msra.mxu0 0
        %1136 = vmatprep.mubr.bf16.mxu0 0
        %1137 = vmatmul.mubr.bf16.gmra.mrb[0].mxu0 %v1099
        %v1138 = vpop.f32.mrb[0].mxu0
        %v1139 = vadd.f32 0.0, %v1138
        %v1140 = vpop.f32.mrb[0].mxu0
        %v1141 = vpop.f32.mrb[0].mxu0
        %v1142 = vpop.f32.mrb[0].mxu0
        %1143 = vdwg.mxu0
        %v1145 = vsel %vm818, %v1049, 0
        %v1148 = vsel %vm1054, %v816, 0
        %1150 = vmatprep.subr.bf16.mxu0 0
        %1151 = vmatpush1.bf16.msra.mxu0 %v1148
        %1152 = vmatprep.subr.bf16.mxu0 0
        %1153 = vmatpush1.bf16.msra.mxu0 0
        %1154 = vmatprep.subr.bf16.mxu0 0
        %1155 = vmatpush1.bf16.msra.mxu0 0
        %1156 = vmatprep.subr.bf16.mxu0 0
        %1157 = vmatpush1.bf16.msra.mxu0 0
        %1158 = vmatprep.subr.bf16.mxu0 0
        %1159 = vmatpush1.bf16.msra.mxu0 0
        %1160 = vmatprep.subr.bf16.mxu0 0
        %1161 = vmatpush1.bf16.msra.mxu0 0
        %1162 = vmatprep.subr.bf16.mxu0 0
        %1163 = vmatpush1.bf16.msra.mxu0 0
        %1164 = vmatprep.subr.bf16.mxu0 0
        %1165 = vmatpush1.bf16.msra.mxu0 0
        %1166 = vmatprep.subr.bf16.mxu0 0
        %1167 = vmatpush1.bf16.msra.mxu0 0
        %1168 = vmatprep.subr.bf16.mxu0 0
        %1169 = vmatpush1.bf16.msra.mxu0 0
        %1170 = vmatprep.subr.bf16.mxu0 0
        %1171 = vmatpush1.bf16.msra.mxu0 0
        %1172 = vmatprep.subr.bf16.mxu0 0
        %1173 = vmatpush1.bf16.msra.mxu0 0
        %1174 = vmatprep.subr.bf16.mxu0 0
        %1175 = vmatpush1.bf16.msra.mxu0 0
        %1176 = vmatprep.subr.bf16.mxu0 0
        %1177 = vmatpush1.bf16.msra.mxu0 0
        %1178 = vmatprep.subr.bf16.mxu0 0
        %1179 = vmatpush1.bf16.msra.mxu0 0
        %1180 = vmatprep.subr.bf16.mxu0 0
        %1181 = vmatpush1.bf16.msra.mxu0 0
        %1182 = vmatprep.mubr.bf16.mxu0 0
        %1183 = vmatmul.mubr.bf16.gmra.mrb[0].mxu0 %v1145
        %v1184 = vpop.f32.mrb[0].mxu0
        %v1185 = vadd.f32 0.0, %v1184
        %v1186 = vpop.f32.mrb[0].mxu0
        %v1187 = vpop.f32.mrb[0].mxu0
        %v1188 = vpop.f32.mrb[0].mxu0
        %1189 = vdwg.mxu0
        %v1191 = vsel %vm818, %v1050, 0
        %v1194 = vsel %vm1054, %v817, 0
        %1196 = vmatprep.subr.bf16.mxu0 0
        %1197 = vmatpush1.bf16.msra.mxu0 %v1194
        %1198 = vmatprep.subr.bf16.mxu0 0
        %1199 = vmatpush1.bf16.msra.mxu0 0
        %1200 = vmatprep.subr.bf16.mxu0 0
        %1201 = vmatpush1.bf16.msra.mxu0 0
        %1202 = vmatprep.subr.bf16.mxu0 0
        %1203 = vmatpush1.bf16.msra.mxu0 0
        %1204 = vmatprep.subr.bf16.mxu0 0
        %1205 = vmatpush1.bf16.msra.mxu0 0
        %1206 = vmatprep.subr.bf16.mxu0 0
        %1207 = vmatpush1.bf16.msra.mxu0 0
        %1208 = vmatprep.subr.bf16.mxu0 0
        %1209 = vmatpush1.bf16.msra.mxu0 0
        %1210 = vmatprep.subr.bf16.mxu0 0
        %1211 = vmatpush1.bf16.msra.mxu0 0
        %1212 = vmatprep.subr.bf16.mxu0 0
        %1213 = vmatpush1.bf16.msra.mxu0 0
        %1214 = vmatprep.subr.bf16.mxu0 0
        %1215 = vmatpush1.bf16.msra.mxu0 0
        %1216 = vmatprep.subr.bf16.mxu0 0
        %1217 = vmatpush1.bf16.msra.mxu0 0
        %1218 = vmatprep.subr.bf16.mxu0 0
        %1219 = vmatpush1.bf16.msra.mxu0 0
        %1220 = vmatprep.subr.bf16.mxu0 0
        %1221 = vmatpush1.bf16.msra.mxu0 0
        %1222 = vmatprep.subr.bf16.mxu0 0
        %1223 = vmatpush1.bf16.msra.mxu0 0
        %1224 = vmatprep.subr.bf16.mxu0 0
        %1225 = vmatpush1.bf16.msra.mxu0 0
        %1226 = vmatprep.subr.bf16.mxu0 0
        %1227 = vmatpush1.bf16.msra.mxu0 0
        %1228 = vmatprep.mubr.bf16.mxu0 0
        %1229 = vmatmul.mubr.bf16.gmra.mrb[0].mxu0 %v1191
        %v1230 = vpop.f32.mrb[0].mxu0
        %v1231 = vadd.f32 0.0, %v1230
        %v1232 = vpop.f32.mrb[0].mxu0
        %v1233 = vpop.f32.mrb[0].mxu0
        %v1234 = vpop.f32.mrb[0].mxu0
        %1235 = vdwg.mxu0
        %v1236 = vcombine.low %v1093, %v1185
        %v1237 = vcombine.high %v1093, %v1185
        %v1239 = vunpack.c.l.s4 1983009808
        %v1240 = vunpack.c.0.s8 %v1239
        %v1241 = vlaneseq
        %v1242 = vshrl.u32 %v1241, 7
        %v1243 = vsub.s32 %v1240, %v1242
        %v1244 = vrot.slane %v1236, %v1243
        %v1246 = vunpack.c.l.s4 1983009808
        %v1247 = vunpack.c.0.s8 %v1246
        %v1248 = vlaneseq
        %v1249 = vshrl.u32 %v1248, 7
        %v1250 = vsub.s32 %v1247, %v1249
        %v1251 = vrot.slane %v1237, %v1250
        %v1252 = vcombine.low %v1139, %v1231
        %v1253 = vcombine.high %v1139, %v1231
        %v1255 = vunpack.c.l.s4 1983009808
        %v1256 = vunpack.c.0.s8 %v1255
        %v1257 = vlaneseq
        %v1258 = vshrl.u32 %v1257, 7
        %v1259 = vsub.s32 %v1256, %v1258
        %v1260 = vrot.slane %v1252, %v1259
        %v1262 = vunpack.c.l.s4 1983009808
        %v1263 = vunpack.c.0.s8 %v1262
        %v1264 = vlaneseq
        %v1265 = vshrl.u32 %v1264, 7
        %v1266 = vsub.s32 %v1263, %v1265
        %v1267 = vrot.slane %v1253, %v1266
        %v1268 = vcombine.low %v1244, %v1260
        %v1269 = vcombine.high %v1244, %v1260
        %v1271 = vunpack.c.l.s4 1934713408
        %v1272 = vunpack.c.0.s8 %v1271
        %v1273 = vlaneseq
        %v1274 = vshrl.u32 %v1273, 7
        %v1275 = vsub.s32 %v1272, %v1274
        %v1276 = vrot.slane %v1268, %v1275
        %v1278 = vunpack.c.l.s4 1934713408
        %v1279 = vunpack.c.0.s8 %v1278
        %v1280 = vlaneseq
        %v1281 = vshrl.u32 %v1280, 7
        %v1282 = vsub.s32 %v1279, %v1281
        %v1283 = vrot.slane %v1269, %v1282
        %v1284 = vcombine.low %v1251, %v1267
        %v1285 = vcombine.high %v1251, %v1267
        %v1287 = vunpack.c.l.s4 1934713408
        %v1288 = vunpack.c.0.s8 %v1287
        %v1289 = vlaneseq
        %v1290 = vshrl.u32 %v1289, 7
        %v1291 = vsub.s32 %v1288, %v1290
        %v1292 = vrot.slane %v1284, %v1291
        %v1294 = vunpack.c.l.s4 1934713408
        %v1295 = vunpack.c.0.s8 %v1294
        %v1296 = vlaneseq
        %v1297 = vshrl.u32 %v1296, 7
        %v1298 = vsub.s32 %v1295, %v1297
        %v1299 = vrot.slane %v1285, %v1298
        %v1300 = vcombine.high %v1276, 0.0
        %v1301 = vcombine.high %v1283, 0.0
        %v1302 = vcombine.high %v1292, 0.0
        %v1303 = vcombine.high %v1299, 0.0
        %v1304 = vcombine.low %v1276, %v1283
        %v1306 = vunpack.c.l.s4 1983009808
        %v1307 = vunpack.c.0.s8 %v1306
        %v1308 = vlaneseq
        %v1309 = vshrl.u32 %v1308, 7
        %v1310 = vsub.s32 %v1307, %v1309
        %v1311 = vrot.slane %v1304, %v1310
        %v1312 = vcombine.low %v1300, %v1301
        %v1314 = vunpack.c.l.s4 1983009808
        %v1315 = vunpack.c.0.s8 %v1314
        %v1316 = vlaneseq
        %v1317 = vshrl.u32 %v1316, 7
        %v1318 = vsub.s32 %v1315, %v1317
        %v1319 = vrot.slane %v1312, %v1318
        %v1320 = vcombine.low %v1292, %v1299
        %v1322 = vunpack.c.l.s4 1983009808
        %v1323 = vunpack.c.0.s8 %v1322
        %v1324 = vlaneseq
        %v1325 = vshrl.u32 %v1324, 7
        %v1326 = vsub.s32 %v1323, %v1325
        %v1327 = vrot.slane %v1320, %v1326
        %v1328 = vcombine.low %v1302, %v1303
        %v1330 = vunpack.c.l.s4 1983009808
        %v1331 = vunpack.c.0.s8 %v1330
        %v1332 = vlaneseq
        %v1333 = vshrl.u32 %v1332, 7
        %v1334 = vsub.s32 %v1331, %v1333
        %v1335 = vrot.slane %v1328, %v1334
        %v1336 = vcombine.low %v1311, %v1319
        %v1337 = vcombine.high %v1311, %v1319
        %v1339 = vunpack.c.l.s4 1934713408
        %v1340 = vunpack.c.0.s8 %v1339
        %v1341 = vlaneseq
        %v1342 = vshrl.u32 %v1341, 7
        %v1343 = vsub.s32 %v1340, %v1342
        %v1344 = vrot.slane %v1336, %v1343
        %v1346 = vunpack.c.l.s4 1934713408
        %v1347 = vunpack.c.0.s8 %v1346
        %v1348 = vlaneseq
        %v1349 = vshrl.u32 %v1348, 7
        %v1350 = vsub.s32 %v1347, %v1349
        %v1351 = vrot.slane %v1337, %v1350
        %v1352 = vcombine.low %v1327, %v1335
        %v1353 = vcombine.high %v1327, %v1335
        %v1355 = vunpack.c.l.s4 1934713408
        %v1356 = vunpack.c.0.s8 %v1355
        %v1357 = vlaneseq
        %v1358 = vshrl.u32 %v1357, 7
        %v1359 = vsub.s32 %v1356, %v1358
        %v1360 = vrot.slane %v1352, %v1359
        %v1362 = vunpack.c.l.s4 1934713408
        %v1363 = vunpack.c.0.s8 %v1362
        %v1364 = vlaneseq
        %v1365 = vshrl.u32 %v1364, 7
        %v1366 = vsub.s32 %v1363, %v1365
        %v1367 = vrot.slane %v1353, %v1366
        %v1368 = vcombine.low %v1344, %v1360
        %v1369 = vcombine.high %v1344, %v1360
        %v1370 = vcombine.low %v1351, %v1367
        %v1371 = vcombine.high %v1351, %v1367
        %1373 = vrot.lane.b32.xlu0 %v1369, 8
        %v1374 = vpop.permute.xlu0 %1373
        %1377 = vrot.lane.b32.xlu0 %v1370, 16
        %v1378 = vpop.permute.xlu0 %1377
        %1381 = vrot.lane.b32.xlu0 %v1371, 24
        %v1382 = vpop.permute.xlu0 %1381
        %v1384 = vsel %vm818, %v1368, %v1374
        %vm1385 = vcmask 130048
        %v1386 = vsel %vm1385, %v1384, %v1378
        %vm1387 = vcmask 195584
        %v1388 = vsel %vm1387, %v1386, %v1382
        %v1389 = vpack.c.bf16 %v1388, %v1388
        %v1390 = vld [vmem:[#allocation8] sm:$0xf]
        %v1391 = vld [vmem:[#allocation8 + $0x4] sm:$0xf]
        %v1392 = vld [vmem:[#allocation8 + $0x8] sm:$0xf]
        %v1393 = vld [vmem:[#allocation8 + $0xc] sm:$0xf]
        %v1394 = vld [vmem:[#allocation10] sm:$0x1]
        %v1396 = vlaneseq
        %v1397 = vshrl.u32 %v1396, 7
        %v1398 = vsub.s32 0, %v1397
        %v1399 = vrot.slane %v1394, %v1398
        %v1405 = vunpack.c.l.b16 %v1390
        %v1406 = vunpack.c.l.b16 %v1391
        %v1407 = vunpack.c.l.b16 %v1392
        %v1408 = vunpack.c.l.b16 %v1393
        %v1409 = vpack.c.b16 %v1406, %v1405
        %v1410 = vpack.c.b16 %v1408, %v1407
        %v1414 = vsel %vm320, %v1389, 0
        %1416 = vmatprep.subr.bf16.mxu0 0
        %1417 = vmatpush1.bf16.msra.mxu0 %v1409
        %1418 = vmatprep.subr.bf16.mxu0 0
        %1419 = vmatpush1.bf16.msra.mxu0 %v1410
        %1420 = vmatprep.subr.bf16.mxu0 0
        %1421 = vmatpush1.bf16.msra.mxu0 0
        %1422 = vmatprep.subr.bf16.mxu0 0
        %1423 = vmatpush1.bf16.msra.mxu0 0
        %1424 = vmatprep.subr.bf16.mxu0 0
        %1425 = vmatpush1.bf16.msra.mxu0 0
        %1426 = vmatprep.subr.bf16.mxu0 0
        %1427 = vmatpush1.bf16.msra.mxu0 0
        %1428 = vmatprep.subr.bf16.mxu0 0
        %1429 = vmatpush1.bf16.msra.mxu0 0
        %1430 = vmatprep.subr.bf16.mxu0 0
        %1431 = vmatpush1.bf16.msra.mxu0 0
        %1432 = vmatprep.subr.bf16.mxu0 0
        %1433 = vmatpush1.bf16.msra.mxu0 0
        %1434 = vmatprep.subr.bf16.mxu0 0
        %1435 = vmatpush1.bf16.msra.mxu0 0
        %1436 = vmatprep.subr.bf16.mxu0 0
        %1437 = vmatpush1.bf16.msra.mxu0 0
        %1438 = vmatprep.subr.bf16.mxu0 0
        %1439 = vmatpush1.bf16.msra.mxu0 0
        %1440 = vmatprep.subr.bf16.mxu0 0
        %1441 = vmatpush1.bf16.msra.mxu0 0
        %1442 = vmatprep.subr.bf16.mxu0 0
        %1443 = vmatpush1.bf16.msra.mxu0 0
        %1444 = vmatprep.subr.bf16.mxu0 0
        %1445 = vmatpush1.bf16.msra.mxu0 0
        %1446 = vmatprep.subr.bf16.mxu0 0
        %1447 = vmatpush1.bf16.msra.mxu0 0
        %1448 = vmatprep.mubr.bf16.mxu0 0
        %1449 = vmatmul.mubr.bf16.gmra.mrb[0].mxu0 %v1414
        %v1450 = vpop.f32.mrb[0].mxu0
        %v1451 = vadd.f32 %v1399, %v1450
        %v1452 = vpop.f32.mrb[0].mxu0
        %v1453 = vpop.f32.mrb[0].mxu0
        %v1454 = vpop.f32.mrb[0].mxu0
        %1455 = vdwg.mxu0
        %1456 = vst.msk [vmem:[%s293] sm:$0xff] %vm320, %v1451
        %s1457 = sand.u32 %s142, 1
        %s1458 = scalar_lea.sflag [#allocation4], %s1457
        %s1459 = sand.u32 %s142, 1
        %s1460 = smul.addr %s1459, 8
        %s1461 = scalar_lea.vmem [#allocation11], %s1460
        // Predicated region
        $region61: #{tpu_custom_call.1} parent=39 // pred_check
          %p1462 = pneg %p152
        $region62: #{tpu_custom_call.1} parent=39 // pred_check_branch
          %1464 = sbr.rel (%p1462) target = $region64
        $region63: #{tpu_custom_call.1} parent=39 // pred_region
          %s1466 = ssub.s32 128, 128
          %1467 = vsyncadd %s1458, %s1466
          %s1468 = smul.addr %s24, 128
          %s1469 = scalar_lea.hbm %s5, %s1468
          %s1471 = sshll.u32 %s1461, 4
          %s1472 = int_to_ptr.vmem [resolvable:$true] %s1471
          %1474 = dma.vmem_to_hbm [thread:$0]  %s1472, 128, %s1469, %s1458
        $region64: #{tpu_custom_call.1} parent=39 // pred_fallthru
          _
      $region40: #{tpu_custom_call.1} parent=5 // pred_fallthru
        _
      %p1475 = scmp.le.s32.totalorder 2, %s19
      // Predicated region
      $region65: #{tpu_custom_call.1} parent=5 // pred_check
        %p1476 = pneg %p1475
      $region66: #{tpu_custom_call.1} parent=5 // pred_check_branch
        %1478 = sbr.rel (%p1476) target = $region68
      $region67: #{tpu_custom_call.1} parent=5 // pred_region
        %s1479 = ssub.s32 %s19, 2
        // Predicated region
        $region69: #{tpu_custom_call.1} parent=67 // pred_check
          %p1480 = pneg %p158
        $region70: #{tpu_custom_call.1} parent=67 // pred_check_branch
          %1482 = sbr.rel (%p1480) target = $region72
        $region71: #{tpu_custom_call.1} parent=67 // pred_region
          %s1483 = sand.u32 %s143, 1
          %s1484 = scalar_lea.sflag [#allocation4], %s1483
          %s1485 = sand.u32 %s143, 1
          %s1486 = smul.addr %s1485, 8
          %s1487 = scalar_lea.vmem [#allocation11], %s1486
          %1488 = dma.done %s1484, 128
        $region72: #{tpu_custom_call.1} parent=67 // pred_fallthru
          _
      $region68: #{tpu_custom_call.1} parent=5 // pred_fallthru
        _
    $region6: #{tpu_custom_call.1} parent=1 // loop_footer
      %s23 = sadd.s32 1, %s19
    $region7: #{tpu_custom_call.1} parent=1 // loop_footer_branch
      %18 = sbr.rel target = $region3
    $region8: #{tpu_custom_call.1} parent=1 // loop_exit
      _
    %1489 = vsyncpa [#allocation3], 1
    %s1490 = scalar_lea.sflag [#allocation3], 1
    %1491 = vsyncpa %s1490, 1
    %1492 = vsyncpa [#allocation6], 1
    %1493 = vsyncpa [#allocation9], 1
    %1494 = vsyncpa [#allocation4], 1
    %s1495 = scalar_lea.sflag [#allocation4], 1
    %1496 = vsyncpa %s1495, 1

</llo_original>
